<compile_context>
chip_gen: v6e
topology: v6e:2x2x1
jax: 0.10.0
libtpu: 0.0.40
codegen_flags: <defaults>
</compile_context>

<pallas_src>
import functools

import jax
import jax.numpy as jnp
from jax import lax
from jax.experimental import pallas as pl
from jax.experimental.pallas import tpu as pltpu

_LANES = 128


def _bpr_kernel(pos_ref, neg_ref, out_ref, acc_ref, *, n_valid, tile_rows):
    # Grid: single reduction axis over row-tiles ("arbitrary").
    k = pl.program_id(0)
    num_k = pl.num_programs(0)

    @pl.when(k == 0)
    def _():
        acc_ref[...] = jnp.zeros_like(acc_ref)

    # Upcast (no-op for f32 inputs, cheap VPU convert for bf16) then compute
    # the numerically stable log(sigmoid(d)) = min(d, 0) - log1p(exp(-|d|)).
    d = pos_ref[...].astype(jnp.float32) - neg_ref[...].astype(jnp.float32)
    ll = jnp.minimum(d, 0.0) - jnp.log1p(jnp.exp(-jnp.abs(d)))

    is_last = k == num_k - 1

    # Steady state: pure accumulate, no masking work.
    @pl.when(jnp.logical_not(is_last))
    def _():
        acc_ref[...] += ll

    # Last tile: mask the ragged / zero-padded tail, then do the single
    # cross-lane reduction and write the scalar partial sum.
    @pl.when(is_last)
    def _():
        # int32 index math: valid for n < 2^31 elements (loss batches are
        # far below this).
        base = k * (tile_rows * _LANES)
        row_ids = lax.broadcasted_iota(jnp.int32, ll.shape, 0)
        lane_ids = lax.broadcasted_iota(jnp.int32, ll.shape, 1)
        flat_idx = base + row_ids * _LANES + lane_ids
        valid = flat_idx < n_valid
        # Select (not multiply-by-mask) so NaN/Inf in the unspecified tail of
        # a partial block cannot reach the accumulator.
        acc_ref[...] += jnp.where(valid, ll, 0.0)
        out_ref[0, 0] = jnp.sum(acc_ref[...])


def bpr_loss(positive_predictions, negative_predictions, *, max_tile_rows=2048):
    pos = jnp.asarray(positive_predictions)
    neg = jnp.asarray(negative_predictions)
    assert pos.shape == neg.shape
    dtype = jnp.promote_types(pos.dtype, neg.dtype)
    if not jnp.issubdtype(dtype, jnp.floating):
        dtype = jnp.float32
    pos = pos.reshape(-1).astype(dtype)
    neg = neg.reshape(-1).astype(dtype)
    n = pos.shape[0]

    # Pad only to the next multiple of 128 (needed for the 2-D reshape).
    # When n % 128 == 0 no pad op is emitted and the reshape is a bitcast.
    rows = pl.cdiv(n, _LANES)
    n_128 = rows * _LANES
    if n_128 != n:
        pos = jnp.pad(pos, (0, n_128 - n))
        neg = jnp.pad(neg, (0, n_128 - n))
    pos2d = pos.reshape(rows, _LANES)
    neg2d = neg.reshape(rows, _LANES)

    # Block: (tile_rows, 128).  For small inputs the block equals the full
    # array (allowed even if rows % 8 != 0); for large inputs it is 2048 rows
    # (1 MiB f32 per stream per buffer) and the last block may be ragged.
    tile_rows = min(max_tile_rows, rows)
    num_tiles = pl.cdiv(rows, tile_rows)

    in_spec = pl.BlockSpec((tile_rows, _LANES), lambda k: (k, 0))

    itemsize = jnp.dtype(dtype).itemsize
    cost = pl.CostEstimate(
        flops=8 * n,
        transcendentals=2 * n,
        bytes_accessed=2 * n * itemsize + 4,
    )

    total = pl.pallas_call(
        functools.partial(_bpr_kernel, n_valid=n, tile_rows=tile_rows),
        out_shape=jax.ShapeDtypeStruct((1, 1), jnp.float32),
        grid=(num_tiles,),
        in_specs=[in_spec, in_spec],
        out_specs=pl.BlockSpec((1, 1), lambda k: (0, 0),
                               memory_space=pltpu.SMEM),
        scratch_shapes=[pltpu.VMEM((tile_rows, _LANES), jnp.float32)],
        compiler_params=pltpu.CompilerParams(
            dimension_semantics=("arbitrary",)),
        cost_estimate=cost,
    )(pos2d, neg2d)

    return -(total[0, 0] / jnp.float32(n))


def bpr_loss_ref(pos, neg):
    pos = jnp.asarray(pos, jnp.float32)
    neg = jnp.asarray(neg, jnp.float32)
    return -jnp.mean(jnp.log(jax.nn.sigmoid(pos - neg)))


if __name__ == "__main__":
    key = jax.random.PRNGKey(0)

    # Small batch consistent with the module (a batch of prediction scores);
    # deliberately not a multiple of 128 to exercise in-kernel tail masking.
    k1, k2 = jax.random.split(key)
    batch = 1000
    positive_predictions = jax.random.normal(k1, (batch,), jnp.float32)
    negative_predictions = jax.random.normal(k2, (batch,), jnp.float32)

    loss = jax.block_until_ready(
        bpr_loss(positive_predictions, negative_predictions))
    ref = bpr_loss_ref(positive_predictions, negative_predictions)
    assert jnp.allclose(loss, ref, rtol=1e-5, atol=1e-6), (loss, ref)

    # Larger batch: multi-tile grid with a ragged (partial) final block,
    # exercising the no-over-DMA path.
    k3, k4 = jax.random.split(jax.random.PRNGKey(1))
    batch_big = 300_000
    pos_big = jax.random.normal(k3, (batch_big,), jnp.float32)
    neg_big = jax.random.normal(k4, (batch_big,), jnp.float32)
    loss_big = jax.block_until_ready(bpr_loss(pos_big, neg_big))
    ref_big = bpr_loss_ref(pos_big, neg_big)
    assert jnp.allclose(loss_big, ref_big, rtol=1e-4, atol=1e-6), (loss_big, ref_big)

    # bf16 inputs are accepted directly (half the HBM bytes); the kernel
    # upcasts to f32 before the subtract so math matches the f32 reference
    # applied to the same bf16 values.
    pos_bf = positive_predictions.astype(jnp.bfloat16)
    neg_bf = negative_predictions.astype(jnp.bfloat16)
    loss_bf = jax.block_until_ready(bpr_loss(pos_bf, neg_bf))
    ref_bf = bpr_loss_ref(pos_bf.astype(jnp.float32), neg_bf.astype(jnp.float32))
    assert jnp.allclose(loss_bf, ref_bf, rtol=1e-4, atol=1e-5), (loss_bf, ref_bf)

    print("KERNEL_OK")
</pallas_src>

<mosaic_0001>
module attributes {stable_mosaic.version = 11 : i64} {
  func.func @_bpr_kernel(%arg0: i32, %arg1: memref<8x128xf32, #tpu.memory_space<vmem>>, %arg2: memref<8x128xf32, #tpu.memory_space<vmem>>, %arg3: memref<1x1xf32, #tpu.memory_space<smem>>, %arg4: memref<8x128xf32, #tpu.memory_space<vmem>>) attributes {dimension_semantics = [#tpu.dimension_semantics<arbitrary>], iteration_bounds = array<i64: 1>, scalar_prefetch = 0 : i64, scratch_operands = 1 : i64, tpu.core_type = #tpu.core_type<tc>, window_params = [{transform_indices = @transform_0, window_bounds = array<i64: 8, 128>}, {transform_indices = @transform_1, window_bounds = array<i64: 8, 128>}, {transform_indices = @transform_2, window_bounds = array<i64: 1, 1>}]} {
    %c0_i32 = arith.constant 0 : i32
    %0 = arith.cmpi eq, %arg0, %c0_i32 : i32
    %1 = arith.extui %0 : i1 to i32
    %c0_i32_0 = arith.constant 0 : i32
    %2 = arith.cmpi ne, %1, %c0_i32_0 : i32
    scf.if %2 {
      %cst_8 = arith.constant 0.000000e+00 : f32
      %20 = vector.broadcast %cst_8 : f32 to vector<8x128xf32>
      %c0_9 = arith.constant 0 : index
      %c0_10 = arith.constant 0 : index
      %21 = vector.load %arg4[%c0_9, %c0_10] : memref<8x128xf32, #tpu.memory_space<vmem>>, vector<8x128xf32>
      tpu.vector_store %arg4[%c0_9, %c0_10], %20 {strides = array<i32>} : memref<8x128xf32, #tpu.memory_space<vmem>>, vector<8x128xf32>,
    } else {
    }
    %c0 = arith.constant 0 : index
    %c0_1 = arith.constant 0 : index
    %3 = vector.load %arg1[%c0, %c0_1] : memref<8x128xf32, #tpu.memory_space<vmem>>, vector<8x128xf32>
    %c0_2 = arith.constant 0 : index
    %c0_3 = arith.constant 0 : index
    %4 = vector.load %arg2[%c0_2, %c0_3] : memref<8x128xf32, #tpu.memory_space<vmem>>, vector<8x128xf32>
    %5 = arith.subf %3, %4 : vector<8x128xf32>
    %cst = arith.constant 0.000000e+00 : f32
    %6 = vector.broadcast %cst : f32 to vector<8x128xf32>
    %7 = arith.minimumf %5, %6 : vector<8x128xf32>
    %8 = math.absf %5 : vector<8x128xf32>
    %cst_4 = arith.constant 0.000000e+00 : f32
    %9 = vector.broadcast %cst_4 : f32 to vector<8x128xf32>
    %10 = arith.subf %9, %8 : vector<8x128xf32>
    %11 = math.exp %10 : vector<8x128xf32>
    %12 = math.log1p %11 : vector<8x128xf32>
    %13 = arith.subf %7, %12 : vector<8x128xf32>
    %c0_i32_5 = arith.constant 0 : i32
    %14 = arith.cmpi eq, %arg0, %c0_i32_5 : i32
    %true = arith.constant true
    %15 = arith.xori %14, %true : i1
    %16 = arith.extui %15 : i1 to i32
    %c0_i32_6 = arith.constant 0 : i32
    %17 = arith.cmpi ne, %16, %c0_i32_6 : i32
    scf.if %17 {
      %c0_8 = arith.constant 0 : index
      %c0_9 = arith.constant 0 : index
      %20 = vector.load %arg4[%c0_8, %c0_9] : memref<8x128xf32, #tpu.memory_space<vmem>>, vector<8x128xf32>
      %21 = arith.addf %20, %13 : vector<8x128xf32>
      %c0_10 = arith.constant 0 : index
      %c0_11 = arith.constant 0 : index
      %22 = vector.load %arg4[%c0_10, %c0_11] : memref<8x128xf32, #tpu.memory_space<vmem>>, vector<8x128xf32>
      tpu.vector_store %arg4[%c0_10, %c0_11], %21 {strides = array<i32>} : memref<8x128xf32, #tpu.memory_space<vmem>>, vector<8x128xf32>,
    } else {
    }
    %18 = arith.extui %14 : i1 to i32
    %c0_i32_7 = arith.constant 0 : i32
    %19 = arith.cmpi ne, %18, %c0_i32_7 : i32
    scf.if %19 {
      %c1024_i32 = arith.constant 1024 : i32
      %20 = arith.muli %arg0, %c1024_i32 : i32
      %21 = tpu.iota {dimensions = array<i32: 0>} : vector<8x128xi32>
      %22 = tpu.iota {dimensions = array<i32: 1>} : vector<8x128xi32>
      %c128_i32 = arith.constant 128 : i32
      %23 = vector.broadcast %c128_i32 : i32 to vector<8x128xi32>
      %24 = arith.muli %21, %23 : vector<8x128xi32>
      %25 = vector.broadcast %20 : i32 to vector<8x128xi32>
      %26 = arith.addi %25, %24 : vector<8x128xi32>
      %27 = arith.addi %26, %22 : vector<8x128xi32>
      %c1000_i32 = arith.constant 1000 : i32
      %28 = vector.broadcast %c1000_i32 : i32 to vector<8x128xi32>
      %29 = arith.cmpi slt, %27, %28 : vector<8x128xi32>
      %c0_8 = arith.constant 0 : index
      %c0_9 = arith.constant 0 : index
      %30 = vector.load %arg4[%c0_8, %c0_9] : memref<8x128xf32, #tpu.memory_space<vmem>>, vector<8x128xf32>
      %cst_10 = arith.constant 0.000000e+00 : f32
      %31 = vector.broadcast %cst_10 : f32 to vector<8x128xf32>
      %32 = arith.select %29, %13, %31 : vector<8x128xi1>, vector<8x128xf32>
      %33 = arith.addf %30, %32 : vector<8x128xf32>
      %c0_11 = arith.constant 0 : index
      %c0_12 = arith.constant 0 : index
      %34 = vector.load %arg4[%c0_11, %c0_12] : memref<8x128xf32, #tpu.memory_space<vmem>>, vector<8x128xf32>
      tpu.vector_store %arg4[%c0_11, %c0_12], %33 {strides = array<i32>} : memref<8x128xf32, #tpu.memory_space<vmem>>, vector<8x128xf32>,
      %c0_13 = arith.constant 0 : index
      %c0_14 = arith.constant 0 : index
      %35 = vector.load %arg4[%c0_13, %c0_14] : memref<8x128xf32, #tpu.memory_space<vmem>>, vector<8x128xf32>
      %36 = vector.shape_cast %35 : vector<8x128xf32> to vector<1x8x128xf32>
      %cst_15 = arith.constant dense<0.000000e+00> : vector<1xf32>
      %37 = vector.multi_reduction <add>, %36, %cst_15 [1, 2] : vector<1x8x128xf32> to vector<1xf32>
      %38 = vector.shape_cast %37 : vector<1xf32> to vector<1x1x1xf32>
      %39 = vector.extract %38[0, 0, 0] : f32 from vector<1x1x1xf32>
      %c0_16 = arith.constant 0 : index
      %c0_17 = arith.constant 0 : index
      %40 = memref.load %arg3[%c0_16, %c0_17] : memref<1x1xf32, #tpu.memory_space<smem>>
      memref.store %39, %arg3[%c0_16, %c0_17] : memref<1x1xf32, #tpu.memory_space<smem>>
    } else {
    }
    return
  }
  func.func @transform_0(%arg0: i32) -> (i32, i32) {
    %c0_i32 = arith.constant 0 : i32
    %c0_i32_0 = arith.constant 0 : i32
    return %arg0, %c0_i32 : i32, i32
  }
  func.func @transform_1(%arg0: i32) -> (i32, i32) {
    %c0_i32 = arith.constant 0 : i32
    %c0_i32_0 = arith.constant 0 : i32
    return %arg0, %c0_i32 : i32, i32
  }
  func.func @transform_2(%arg0: i32) -> (i32, i32) {
    %c0_i32 = arith.constant 0 : i32
    %c0_i32_0 = arith.constant 0 : i32
    %c0_i32_1 = arith.constant 0 : i32
    return %c0_i32, %c0_i32_0 : i32, i32
  }
}

</mosaic_0001>

<llo_original>
// kernel: tpu_custom_call.1
$region0: #{tpu_custom_call.1}
  #allocation0 [shape = 'u32[]', space=smem, size = 0x4, offset = 0x4, fixed_abs, tag = 'smem constant byte address 0x4 - core index']
  #allocation1 [shape = 'u32[144,128]{1,0:T(1,128)}', space=vmem, size = 0x12000, scoped, tag = 'internal scratch']
  #allocation2 [shape = 'f32[8,128]{1,0:T(8,128)}', space=vmem, size = 0x1000, scoped, tag = 'scratch operand']
  %s0 = inlined_call_operand.hbm [shape: f32[8,128], index: 0, kind: input, shape index: {}]
  %s1 = inlined_call_operand.hbm [shape: f32[8,128], index: 1, kind: input, shape index: {}]
  %s2 = inlined_call_operand.hbm [shape: f32[1,1], index: 2, kind: output, shape index: {}]
  %s3 = sld [smem:[#allocation0]]
  $region38: #{tpu_custom_call.1} parent=0
    _
  %s5 = ssub.s32 1, %s3
  %s6 = scalar_select 0, %s5, %s3
  $region1: #{tpu_custom_call.1} parent=0
    #allocation3 [shape = 'u8[4096]{0}', space=vmem, size = 0x1000, scoped, tag = 'input window, operand 0, single buffered']
    #allocation4 [shape = 's32[1]{0}', space=sflag, size = 0x4, scoped, tag = 'scoped memory for tpu_custom_call.1']
    #allocation5 [shape = 's32[1]{0}', space=sflag, size = 0x4, scoped, tag = 'scoped memory for tpu_custom_call.1']
    #allocation6 [shape = 'u8[4096]{0}', space=vmem, size = 0x1000, scoped, tag = 'input window, operand 1, single buffered']
    #allocation7 [shape = 's32[1]{0}', space=sflag, size = 0x4, scoped, tag = 'scoped memory for tpu_custom_call.1']
    #allocation8 [shape = 'u8[512]{0}', space=smem, size = 0x200, scoped, tag = 'output window, operand 0, single buffered']
    %7 = vsyncpa [#allocation4], 0
    %8 = vsyncpa [#allocation7], 0
    %9 = vsyncpa [#allocation5], 0
    // Predicated region
    $region2: #{tpu_custom_call.1} parent=1 // pred_check
      _
    $region3: #{tpu_custom_call.1} parent=1 // pred_check_branch
      %11 = sbr.rel (0) target = $region5
    $region4: #{tpu_custom_call.1} parent=1 // pred_region
      %s13 = ssub.s32 128, 128
      %14 = vsyncadd [#allocation4], %s13
      %s16 = sshll.u32 [#allocation3], 4
      %s17 = int_to_ptr.vmem [resolvable:$true] %s16
      %19 = dma.hbm_to_vmem [thread:$0]  %s0, 128, %s17, [#allocation4]
    $region5: #{tpu_custom_call.1} parent=1 // pred_fallthru
      _
    // Predicated region
    $region6: #{tpu_custom_call.1} parent=1 // pred_check
      _
    $region7: #{tpu_custom_call.1} parent=1 // pred_check_branch
      %21 = sbr.rel (0) target = $region9
    $region8: #{tpu_custom_call.1} parent=1 // pred_region
      %s23 = ssub.s32 128, 128
      %24 = vsyncadd [#allocation7], %s23
      %s26 = sshll.u32 [#allocation6], 4
      %s27 = int_to_ptr.vmem [resolvable:$true] %s26
      %29 = dma.hbm_to_vmem [thread:$0]  %s1, 128, %s27, [#allocation7]
    $region9: #{tpu_custom_call.1} parent=1 // pred_fallthru
      _
    // Predicated region
    $region10: #{tpu_custom_call.1} parent=1 // pred_check
      _
    $region11: #{tpu_custom_call.1} parent=1 // pred_check_branch
      %31 = sbr.rel (0) target = $region13
    $region12: #{tpu_custom_call.1} parent=1 // pred_region
      %32 = dma.done [#allocation4], 128
    $region13: #{tpu_custom_call.1} parent=1 // pred_fallthru
      _
    // Predicated region
    $region14: #{tpu_custom_call.1} parent=1 // pred_check
      _
    $region15: #{tpu_custom_call.1} parent=1 // pred_check_branch
      %34 = sbr.rel (0) target = $region17
    $region16: #{tpu_custom_call.1} parent=1 // pred_region
      %35 = dma.done [#allocation7], 128
    $region17: #{tpu_custom_call.1} parent=1 // pred_fallthru
      _
    %p36 = scmp.eq.s32.totalorder 0, 0
    // Predicated region
    $region18: #{tpu_custom_call.1} parent=1 // pred_check
      %p37 = pneg %p36
    $region19: #{tpu_custom_call.1} parent=1 // pred_check_branch
      %39 = sbr.rel (%p37) target = $region21
    $region20: #{tpu_custom_call.1} parent=1 // pred_region
      %40 = vst [vmem:[#allocation2] sm:$0xff] 0.0
    $region21: #{tpu_custom_call.1} parent=1 // pred_fallthru
      _
    %v41 = vld [vmem:[#allocation3] sm:$0xff]
    %v42 = vld [vmem:[#allocation6] sm:$0xff]
    %v43 = vsub.f32 %v41, %v42
    %v44 = vmin.f32 %v43, 0.0
    %v45 = vand.u32 2147483647, %v43
    %v46 = vsub.f32 0.0, %v45
    %v47 = vmul.f32 %v46, 1.442695
    %v48 = vpow.pop %v47
    %v49 = vadd.f32 %v48, 1.0
    %v50 = vlog2.pop %v49
    %v51 = vmul.f32 %v50, 0.6931472
    %v52 = vmul.f32 -0.5, %v48
    %v53 = vadd.f32 %v52, 1.0
    %v54 = vmul.f32 %v53, %v48
    %v55 = vand.u32 2147483647, %v48
    %vm56 = vcmp.lt.f32.partialorder %v55, 0.0004427343
    %v57 = vsel %vm56, %v54, %v51
    %v58 = vsub.f32 %v44, %v57
    %p59 = scmp.ne.s32.totalorder 0, 0
    // Predicated region
    $region22: #{tpu_custom_call.1} parent=1 // pred_check
      %p60 = pneg %p59
    $region23: #{tpu_custom_call.1} parent=1 // pred_check_branch
      %62 = sbr.rel (%p60) target = $region25
    $region24: #{tpu_custom_call.1} parent=1 // pred_region
      %v63 = vld [vmem:[#allocation2] sm:$0xff]
      %v64 = vadd.f32 %v63, %v58
      %65 = vst [vmem:[#allocation2] sm:$0xff] %v64
    $region25: #{tpu_custom_call.1} parent=1 // pred_fallthru
      _
    // Predicated region
    $region26: #{tpu_custom_call.1} parent=1 // pred_check
      %p66 = pneg %p36
    $region27: #{tpu_custom_call.1} parent=1 // pred_check_branch
      %68 = sbr.rel (%p66) target = $region29
    $region28: #{tpu_custom_call.1} parent=1 // pred_region
      %s69 = smul.u32 0, 1024
      %v70 = vlaneseq
      %v71 = vshrl.u32 %v70, 7
      %v72 = vlaneseq
      %v73 = vand.u32 %v72, 127
      %v74 = vmul.u32 %v71, 128
      %v75 = vstv %s69
      %v76 = vadd.s32 %v75, %v74
      %v77 = vadd.s32 %v76, %v73
      %vm78 = vcmp.lt.s32.totalorder %v77, 1000
      %v79 = vld [vmem:[#allocation2] sm:$0xff]
      %v80 = vsel %vm78, %v58, 0.0
      %v81 = vadd.f32 %v79, %v80
      %82 = vst [vmem:[#allocation2] sm:$0xff] %v81
      %v83 = vld [vmem:[#allocation2] sm:$0xff]
      %84 = vadd.xlane.f32.xlu0 %v83
      %v85 = vpop.xlane.xlu0 %84
      %v86 = vrot.slane %v85, 4
      %v87 = vadd.f32 %v85, %v86
      %v88 = vrot.slane %v87, 2
      %v89 = vadd.f32 %v87, %v88
      %v90 = vrot.slane %v89, 1
      %v91 = vadd.f32 %v89, %v90
      %s92 = vtos %v91
      %s93 = scalar_lea.smem [#allocation8], 0
      %94 = sst [smem:[%s93]] %s92
    $region29: #{tpu_custom_call.1} parent=1 // pred_fallthru
      _
    // Predicated region
    $region30: #{tpu_custom_call.1} parent=1 // pred_check
      _
    $region31: #{tpu_custom_call.1} parent=1 // pred_check_branch
      %96 = sbr.rel (0) target = $region33
    $region32: #{tpu_custom_call.1} parent=1 // pred_region
      %s98 = ssub.s32 16, 16
      %99 = vsyncadd [#allocation5], %s98
      %102 = dma.smem_to_hbm [#allocation8], 16, %s2, [#allocation5]
    $region33: #{tpu_custom_call.1} parent=1 // pred_fallthru
      _
    // Predicated region
    $region34: #{tpu_custom_call.1} parent=1 // pred_check
      _
    $region35: #{tpu_custom_call.1} parent=1 // pred_check_branch
      %104 = sbr.rel (0) target = $region37
    $region36: #{tpu_custom_call.1} parent=1 // pred_region
      %105 = dma.done [#allocation5], 16
    $region37: #{tpu_custom_call.1} parent=1 // pred_fallthru
      _
    %106 = sfence
    %107 = vsyncpa [#allocation4], 1
    %108 = vsyncpa [#allocation7], 1
    %109 = vsyncpa [#allocation5], 1

</llo_original>
